<compile_context>
chip_gen: v7x
topology: tpu7x:2x2x1
jax: 0.10.0
libtpu: 0.0.40
codegen_flags: <defaults>
</compile_context>

<pallas_src>
import math
import functools

import jax
import jax.numpy as jnp
from jax import lax
from jax.experimental import pallas as pl
from jax.experimental.pallas import tpu as pltpu


def _round_up(x, m):
    return ((x + m - 1) // m) * m


# ----------------------------------------------------------------------------
# RevIN, mode='norm'. affine_weight=1, affine_bias=0  ->  (x - mean) / stdev
# Layout: one row per (batch, feature) series; rows tiled in >=8-row blocks.
# ----------------------------------------------------------------------------
def _revin_kernel(x_ref, o_ref, *, eps):
    x = x_ref[...].astype(jnp.float32)                          # (R, L)
    mean = jnp.mean(x, axis=1, keepdims=True)
    var = jnp.mean((x - mean) ** 2, axis=1, keepdims=True)      # unbiased=False
    o_ref[...] = ((x - mean) * lax.rsqrt(var + eps)).astype(o_ref.dtype)


def _revin_row_tile(R, cap=1024):
    if R <= cap:
        return R
    for tr in range(cap - cap % 8, 7, -8):
        if R % tr == 0:
            return tr
    return R


def revin_norm_rows(x_rows, eps=1e-5):
    R, L = x_rows.shape
    tr = _revin_row_tile(R)
    return pl.pallas_call(
        functools.partial(_revin_kernel, eps=eps),
        out_shape=jax.ShapeDtypeStruct((R, L), jnp.float32),
        grid_spec=pltpu.PrefetchScalarGridSpec(
            num_scalar_prefetch=0,
            grid=(R // tr,),
            in_specs=[pl.BlockSpec((tr, L), lambda i: (i, 0))],
            out_specs=pl.BlockSpec((tr, L), lambda i: (i, 0)),
        ),
        compiler_params=pltpu.CompilerParams(dimension_semantics=("parallel",)),
    )(x_rows)


# ----------------------------------------------------------------------------
# DataEmbedding = TokenEmbedding (Conv1d k=3, circular, no bias) + PositionalEmb.
# Dropout p=0 -> identity.
#   y[g, t] = x[g,(t-1)%T] @ W0 + x[g,t] @ W1 + x[g,(t+1)%T] @ W2 + pe[t]
# Rows are the flattened (group, t) axis.  The three circular taps are built
# in-kernel (rolls + per-group wrap fix), the PE is applied through appended
# one-hot(t) columns, so everything is one (rows, 3C+T) @ (3C+T, D) matmul.
# Output is bf16 (feeds the bf16 MXU path of the attention kernel).
# ----------------------------------------------------------------------------
def _embed_kernel(x_ref, w_ref, o_ref, *, t_len):
    x = x_ref[...]                                              # (tr, C) f32
    tr = x.shape[0]
    T = t_len
    t = lax.broadcasted_iota(jnp.int32, (tr, 1), 0) % T
    if T > 1:
        # circular shift within each T-row group (blocks hold whole groups)
        x_prev = jnp.where(t == 0,
                           jnp.roll(x, -(T - 1), axis=0), jnp.roll(x, 1, axis=0))
        x_next = jnp.where(t == T - 1,
                           jnp.roll(x, T - 1, axis=0), jnp.roll(x, -1, axis=0))
    else:
        x_prev, x_next = x, x
    col = lax.broadcasted_iota(jnp.int32, (tr, T), 1)
    onehot = (col == t).astype(jnp.float32)                     # PE selector
    xs = jnp.concatenate([x_prev, x, x_next, onehot], axis=1)   # (tr, 3C+T)
    y = jnp.dot(xs, w_ref[...], preferred_element_type=jnp.float32)
    o_ref[...] = y.astype(o_ref.dtype)


def _choose_group_tile(G, T, row_cap=2048):
    """Largest per-step group count whose row tile stays sublane-aligned."""
    if G * T <= row_cap:
        return G
    for tg in range(min(G, max(1, row_cap // T)), 0, -1):
        if G % tg == 0 and (tg * T) % 8 == 0:
            return tg
    # TODO(synk): fallback takes the whole array in one block; may exceed the
    # scoped VMEM limit for extremely large G*T with no 8-aligned divisor.
    return G


def data_embedding(x_rows, w_emb, T, d_model, out_dtype=jnp.bfloat16):
    # x_rows: (G*T, C) f32, w_emb: (3C+T, D) f32 -> (G*T, D) bf16
    rows, C = x_rows.shape
    G = rows // T
    tg = _choose_group_tile(G, T)
    tr = tg * T
    return pl.pallas_call(
        functools.partial(_embed_kernel, t_len=T),
        out_shape=jax.ShapeDtypeStruct((rows, d_model), out_dtype),
        grid_spec=pltpu.PrefetchScalarGridSpec(
            num_scalar_prefetch=0,
            grid=(rows // tr,),
            in_specs=[
                pl.BlockSpec((tr, C), lambda i: (i, 0)),
                pl.BlockSpec((3 * C + T, d_model), lambda i: (0, 0)),
            ],
            out_specs=pl.BlockSpec((tr, d_model), lambda i: (i, 0)),
        ),
        compiler_params=pltpu.CompilerParams(dimension_semantics=("parallel",)),
    )(x_rows, w_emb)


# ----------------------------------------------------------------------------
# DAC attention, both views, one encoder layer per grid step.
#   grid = (B, e_layers); per step:
#     qk  = x(M*S, D) @ [Wq|Wk](D, 2D)  (bf16 MXU, f32 accumulate) + bias
#     per channel m: s = q_m k_m^T / sqrt(dk); p_m = softmax(s)   (f32)
#     P_sum = sum_m p_m                                            (S, S)
#     out(L, Lp) = (1/M) * E_l @ P_sum @ E_r^T      (lane-dense padded store)
# The block-diagonal structure of the original (M*S, M*S) attention makes this
# exactly equal to the einops repeat/tile + channel-mean of the PyTorch model.
# ----------------------------------------------------------------------------
def _dac_attn_kernel(e_ps_ref, e_pn_ref, wqk_ref, bqk_ref,
                     rep_l_ref, rep_r_ref, til_l_ref, til_r_ref,
                     series_ref, prior_ref,
                     *, n_heads, n_channels, s_ps, s_pn, d_model):
    wqk = wqk_ref[0]                                 # (D, 2D) bf16
    bqk = bqk_ref[0]                                 # (1, 2D) f32
    dk = d_model // n_heads
    scale = 1.0 / math.sqrt(dk)
    inv_m = 1.0 / n_channels

    def one_view(x, S, exp_l, exp_r, out_ref):
        # fused Q|K projection, one wide matmul over all channels' rows
        qk = jnp.dot(x, wqk, preferred_element_type=jnp.float32) + bqk
        for h in range(n_heads):
            q0 = h * dk
            k0 = d_model + h * dk
            p_sum = jnp.zeros((S, S), jnp.float32)
            # TODO(synk): for very large channel counts switch this static
            # unroll to a fori_loop / grid axis to bound live ranges.
            for m in range(n_channels):
                r0 = m * S
                qh = qk[r0:r0 + S, q0:q0 + dk]
                kh = qk[r0:r0 + S, k0:k0 + dk]
                s = lax.dot_general(qh, kh, (((1,), (1,)), ((), ())),
                                    preferred_element_type=jnp.float32) * scale
                s = s - jnp.max(s, axis=-1, keepdims=True)
                es = jnp.exp(s)
                p_sum = p_sum + es * pl.reciprocal(
                    jnp.sum(es, axis=-1, keepdims=True), approx=True)
            # channel mean + repeat/tile expansion: E_l(L,S) @ P_sum @ E_r^T(S,Lp)
            left = jnp.dot(exp_l, p_sum, preferred_element_type=jnp.float32)
            full = lax.dot_general(left, exp_r, (((1,), (1,)), ((), ())),
                                   preferred_element_type=jnp.float32) * inv_m
            out_ref[0, 0, h] = full.astype(out_ref.dtype)

    one_view(e_ps_ref[0], s_ps, rep_l_ref[...], rep_r_ref[...], series_ref)
    one_view(e_pn_ref[0], s_pn, til_l_ref[...], til_r_ref[...], prior_ref)


def dac_attention(x_ps, x_pn, wqk_all, bqk_all, rep_l, rep_r, til_l, til_r,
                  n_heads, n_channels):
    # x_ps: (B, M*S_ps, D) bf16, x_pn: (B, M*S_pn, D) bf16
    # -> series, prior: (B, e_layers, H, L, L_pad) f32
    B, ms_ps, D = x_ps.shape
    _, ms_pn, _ = x_pn.shape
    e_layers = wqk_all.shape[0]
    s_ps = ms_ps // n_channels
    s_pn = ms_pn // n_channels
    L = rep_l.shape[0]
    Lp = rep_r.shape[0]
    H = n_heads
    kernel = functools.partial(_dac_attn_kernel, n_heads=H, n_channels=n_channels,
                               s_ps=s_ps, s_pn=s_pn, d_model=D)
    series, prior = pl.pallas_call(
        kernel,
        out_shape=(jax.ShapeDtypeStruct((B, e_layers, H, L, Lp), jnp.float32),
                   jax.ShapeDtypeStruct((B, e_layers, H, L, Lp), jnp.float32)),
        grid_spec=pltpu.PrefetchScalarGridSpec(
            num_scalar_prefetch=0,
            grid=(B, e_layers),
            in_specs=[
                pl.BlockSpec((1, ms_ps, D), lambda b, l: (b, 0, 0)),
                pl.BlockSpec((1, ms_pn, D), lambda b, l: (b, 0, 0)),
                pl.BlockSpec((1, D, 2 * D), lambda b, l: (l, 0, 0)),
                pl.BlockSpec((1, 1, 2 * D), lambda b, l: (l, 0, 0)),
                pl.BlockSpec((L, s_ps), lambda b, l: (0, 0)),
                pl.BlockSpec((Lp, s_ps), lambda b, l: (0, 0)),
                pl.BlockSpec((L, s_pn), lambda b, l: (0, 0)),
                pl.BlockSpec((Lp, s_pn), lambda b, l: (0, 0)),
            ],
            out_specs=[
                pl.BlockSpec((1, 1, H, L, Lp), lambda b, l: (b, l, 0, 0, 0)),
                pl.BlockSpec((1, 1, H, L, Lp), lambda b, l: (b, l, 0, 0, 0)),
            ],
        ),
        compiler_params=pltpu.CompilerParams(
            dimension_semantics=("parallel", "parallel"),
            vmem_limit_bytes=48 * 1024 * 1024),
    )(x_ps, x_pn, wqk_all, bqk_all, rep_l, rep_r, til_l, til_r)
    return series, prior


# ----------------------------------------------------------------------------
# Parameter construction (deterministic, mirrors the module's __init__ shapes)
# ----------------------------------------------------------------------------
def positional_embedding(max_len, d_model):
    position = jnp.arange(max_len, dtype=jnp.float32)[:, None]
    div_term = jnp.exp(jnp.arange(0, d_model, 2, dtype=jnp.float32)
                       * (-math.log(10000.0) / d_model))
    pe = jnp.zeros((max_len, d_model), jnp.float32)
    pe = pe.at[:, 0::2].set(jnp.sin(position * div_term))
    pe = pe.at[:, 1::2].set(jnp.cos(position * div_term))
    return pe


def conv_weight(key, c_in, d_model):
    # nn.Conv1d(c_in, d_model, 3) with kaiming_normal_(fan_in, leaky_relu)
    fan_in = c_in * 3
    gain = math.sqrt(2.0 / (1.0 + 0.01 ** 2))
    std = gain / math.sqrt(fan_in)
    w = jax.random.normal(key, (d_model, c_in, 3), jnp.float32) * std
    return jnp.transpose(w, (2, 1, 0))           # (3, c_in, d_model)


def linear_params(key, d_in, d_out):
    kw, kb = jax.random.split(key)
    bound = 1.0 / math.sqrt(d_in)
    w = jax.random.uniform(kw, (d_in, d_out), jnp.float32, -bound, bound)  # = W.T
    b = jax.random.uniform(kb, (d_out,), jnp.float32, -bound, bound)
    return w, b


def expansion_matrices(L, p, Lp):
    """0/1 expansion matrices fusing repeat-by-p / tile-by-(L//p) with the
    channel-sum expansion; right-hand matrices are zero-padded to Lp columns
    so the final store is lane-dense (slice back to L host-side)."""
    n = L // p
    li = jnp.arange(L)[:, None]
    lip = jnp.arange(Lp)[:, None]
    rep_l = (li // p == jnp.arange(n)[None, :]).astype(jnp.float32)            # (L, n)
    til_l = (li % p == jnp.arange(p)[None, :]).astype(jnp.float32)             # (L, p)
    rep_r = ((lip // p == jnp.arange(n)[None, :]) & (lip < L)).astype(jnp.float32)  # (Lp, n)
    til_r = ((lip % p == jnp.arange(p)[None, :]) & (lip < L)).astype(jnp.float32)   # (Lp, p)
    return rep_l, rep_r, til_l, til_r


class DCdetectorPallas:
    def __init__(self, win_size, enc_in, c_out, n_heads=1, d_model=32, e_layers=2,
                 patch_size=(2, 4), channel=4, dropout=0.0, seed=1234):
        assert channel == enc_in, "DAC channel-mean requires channel == enc_in"
        for p in patch_size:
            assert win_size % p == 0
        assert d_model % n_heads == 0
        self.win_size, self.enc_in = win_size, enc_in
        self.n_heads, self.d_model = n_heads, d_model
        self.e_layers, self.patch_size = e_layers, tuple(patch_size)
        self.l_pad = _round_up(win_size, 128)

        key = jax.random.PRNGKey(seed)
        keys = jax.random.split(key, 2 * len(self.patch_size) + 2 * e_layers)
        ki = iter(keys)

        self.pe = positional_embedding(win_size, d_model)
        self.w3_ps, self.w3_pn = [], []          # raw conv taps (for reference)
        self.w_emb_ps, self.w_emb_pn = [], []    # fused [W0;W1;W2;pe] matrices
        for p in self.patch_size:
            n = win_size // p
            w3p = conv_weight(next(ki), p, d_model)          # patch_size view, C=p
            w3n = conv_weight(next(ki), n, d_model)          # patch_num view,  C=n
            self.w3_ps.append(w3p)
            self.w3_pn.append(w3n)
            self.w_emb_ps.append(
                jnp.concatenate([w3p.reshape(3 * p, d_model), self.pe[:n]], axis=0))
            self.w_emb_pn.append(
                jnp.concatenate([w3n.reshape(3 * n, d_model), self.pe[:p]], axis=0))

        wq_l, bq_l, wk_l, bk_l = [], [], [], []
        for _ in range(e_layers):
            wq, bq = linear_params(next(ki), d_model, d_model)
            wk, bk = linear_params(next(ki), d_model, d_model)
            wq_l.append(wq); bq_l.append(bq)
            wk_l.append(wk); bk_l.append(bk)
        self.wq_all = jnp.stack(wq_l)            # (E, D, D) f32 (reference)
        self.bq_all = jnp.stack(bq_l)            # (E, D)
        self.wk_all = jnp.stack(wk_l)
        self.bk_all = jnp.stack(bk_l)
        # fused [Wq | Wk] in bf16 for the MXU; biases stay f32
        self.wqk_all = jnp.concatenate([self.wq_all, self.wk_all],
                                       axis=2).astype(jnp.bfloat16)   # (E, D, 2D)
        self.bqk_all = jnp.concatenate([self.bq_all, self.bk_all],
                                       axis=1)[:, None, :]            # (E, 1, 2D)
        self.exp_mats = [expansion_matrices(win_size, p, self.l_pad)
                         for p in self.patch_size]
        # NOTE: value/out projections, LayerNorm, window embedding and the final
        # Linear projection never influence (series, prior) when
        # output_attention=True, so they are not materialized or computed.

    def __call__(self, x):
        B, L, M = x.shape
        D, H, E = self.d_model, self.n_heads, self.e_layers
        # RevIN 'norm' on the channel-major (b m) l layout.
        xn = revin_norm_rows(jnp.transpose(x, (0, 2, 1)).reshape(B * M, L))

        series_list, prior_list = [], []
        # TODO(synk): the two per-view embedding calls per patch size could be
        # merged into one pallas_call (stacked rows + view selector) to shave
        # launch overhead further.
        for pi, p in enumerate(self.patch_size):
            n = L // p
            # patch_size view: (B*M) sequences of n patches, feature dim p
            e_ps = data_embedding(xn.reshape(B * M * n, p), self.w_emb_ps[pi], n, D)
            # patch_num view:  (B*M) sequences of p tokens,  feature dim n
            e_pn = data_embedding(xn.reshape(B * M * p, n), self.w_emb_pn[pi], p, D)
            rep_l, rep_r, til_l, til_r = self.exp_mats[pi]
            series_all, prior_all = dac_attention(
                e_ps.reshape(B, M * n, D), e_pn.reshape(B, M * p, D),
                self.wqk_all, self.bqk_all, rep_l, rep_r, til_l, til_r, H, M)
            for li in range(E):
                series_list.append(series_all[:, li, :, :, :L])
                prior_list.append(prior_all[:, li, :, :, :L])
        return series_list, prior_list


# ----------------------------------------------------------------------------
# Pure-jnp reference of the PyTorch forward (for numerical validation, f32)
# ----------------------------------------------------------------------------
def _reference_forward(model, x):
    B, L, M = x.shape
    mean = jnp.mean(x, axis=1, keepdims=True)
    var = jnp.mean((x - mean) ** 2, axis=1, keepdims=True)
    xn = (x - mean) / jnp.sqrt(var + 1e-5)

    def embed(z, w3, pe):
        T = z.shape[1]
        y = (jnp.roll(z, 1, axis=1) @ w3[0] + z @ w3[1]
             + jnp.roll(z, -1, axis=1) @ w3[2])
        return y + pe[:T][None]

    def attn(e, wq, bq, wk, bk, H):
        G, S, D = e.shape
        dk = D // H
        q = (e @ wq + bq).reshape(G, S, H, dk)
        k = (e @ wk + bk).reshape(G, S, H, dk)
        s = jnp.einsum('blhe,bshe->bhls', q, k) / math.sqrt(dk)
        return jax.nn.softmax(s, axis=-1)

    xt = jnp.transpose(xn, (0, 2, 1)).reshape(B * M, L)
    series_list, prior_list = [], []
    for pi, p in enumerate(model.patch_size):
        n = L // p
        e_ps = embed(xt.reshape(B * M, n, p), model.w3_ps[pi], model.pe)
        e_pn = embed(xt.reshape(B * M, p, n), model.w3_pn[pi], model.pe)
        for li in range(model.e_layers):
            wq, bq = model.wq_all[li], model.bq_all[li]
            wk, bk = model.wk_all[li], model.bk_all[li]
            a_ps = attn(e_ps, wq, bq, wk, bk, model.n_heads)   # (B*M, H, n, n)
            a_pn = attn(e_pn, wq, bq, wk, bk, model.n_heads)   # (B*M, H, p, p)
            series = jnp.repeat(jnp.repeat(a_ps, p, axis=2), p, axis=3)
            prior = jnp.tile(a_pn, (1, 1, n, n))
            series = series.reshape(B, M, model.n_heads, L, L).mean(axis=1)
            prior = prior.reshape(B, M, model.n_heads, L, L).mean(axis=1)
            series_list.append(series)
            prior_list.append(prior)
    return series_list, prior_list


if __name__ == "__main__":
    B, L, M = 2, 8, 4                       # batch, win_size, enc_in(=channel)
    d_model, n_heads, e_layers = 32, 1, 2
    patch_size = (2, 4)

    x = jax.random.normal(jax.random.PRNGKey(0), (B, L, M), jnp.float32)

    model = DCdetectorPallas(win_size=L, enc_in=M, c_out=M, n_heads=n_heads,
                             d_model=d_model, e_layers=e_layers,
                             patch_size=patch_size, channel=M, dropout=0.0)
    series, prior = model(x)
    series = [jax.block_until_ready(s) for s in series]
    prior = [jax.block_until_ready(pr) for pr in prior]

    assert len(series) == len(prior) == len(patch_size) * e_layers

    # structural checks: shapes, finiteness, softmax row sums
    idx = 0
    for p in patch_size:
        n = L // p
        for _ in range(e_layers):
            s, pr = series[idx], prior[idx]
            assert s.shape == (B, n_heads, L, L) and pr.shape == (B, n_heads, L, L)
            assert bool(jnp.all(jnp.isfinite(s))) and bool(jnp.all(jnp.isfinite(pr)))
            assert jnp.allclose(jnp.sum(s, axis=-1), float(p), rtol=1e-2, atol=2e-2)
            assert jnp.allclose(jnp.sum(pr, axis=-1), float(n), rtol=1e-2, atol=2e-2)
            idx += 1

    # end-to-end numerical check against a pure-jnp f32 reference of the module
    # (tolerances absorb bf16 MXU inputs + approximate softmax reciprocal)
    ref_series, ref_prior = _reference_forward(model, x)
    for got, want in list(zip(series, ref_series)) + list(zip(prior, ref_prior)):
        err = float(jnp.max(jnp.abs(got - want)))
        assert jnp.allclose(got, want, rtol=3e-2, atol=1e-2), err

    print("KERNEL_OK")
</pallas_src>

<mosaic_0001>
module attributes {stable_mosaic.version = 11 : i64} {
  func.func @_revin_kernel(%arg0: i32, %arg1: memref<8x8xf32, #tpu.memory_space<vmem>>, %arg2: memref<8x8xf32, #tpu.memory_space<vmem>>) attributes {dimension_semantics = [#tpu.dimension_semantics<parallel>], iteration_bounds = array<i64: 1>, scalar_prefetch = 0 : i64, scratch_operands = 0 : i64, tpu.core_type = #tpu.core_type<tc>, window_params = [{transform_indices = @transform_0, window_bounds = array<i64: 8, 8>}, {transform_indices = @transform_1, window_bounds = array<i64: 8, 8>}]} {
    %c0 = arith.constant 0 : index
    %c0_0 = arith.constant 0 : index
    %0 = vector.load %arg1[%c0, %c0_0] : memref<8x8xf32, #tpu.memory_space<vmem>>, vector<8x8xf32>
    %cst = arith.constant dense<0.000000e+00> : vector<8xf32>
    %1 = vector.multi_reduction <add>, %0, %cst [1] : vector<8x8xf32> to vector<8xf32>
    %2 = vector.shape_cast %1 : vector<8xf32> to vector<8x1xf32>
    %cst_1 = arith.constant 8.000000e+00 : f32
    %3 = vector.broadcast %cst_1 : f32 to vector<8x1xf32>
    %4 = arith.divf %2, %3 : vector<8x1xf32>
    %5 = vector.broadcast %4 : vector<8x1xf32> to vector<8x8xf32>
    %6 = arith.subf %0, %5 : vector<8x8xf32>
    %7 = arith.mulf %6, %6 : vector<8x8xf32>
    %cst_2 = arith.constant dense<0.000000e+00> : vector<8xf32>
    %8 = vector.multi_reduction <add>, %7, %cst_2 [1] : vector<8x8xf32> to vector<8xf32>
    %9 = vector.shape_cast %8 : vector<8xf32> to vector<8x1xf32>
    %cst_3 = arith.constant 8.000000e+00 : f32
    %10 = vector.broadcast %cst_3 : f32 to vector<8x1xf32>
    %11 = arith.divf %9, %10 : vector<8x1xf32>
    %12 = vector.broadcast %4 : vector<8x1xf32> to vector<8x8xf32>
    %13 = arith.subf %0, %12 : vector<8x8xf32>
    %cst_4 = arith.constant 9.99999974E-6 : f32
    %14 = vector.broadcast %cst_4 : f32 to vector<8x1xf32>
    %15 = arith.addf %11, %14 : vector<8x1xf32>
    %16 = math.rsqrt %15 : vector<8x1xf32>
    %17 = vector.broadcast %16 : vector<8x1xf32> to vector<8x8xf32>
    %18 = arith.mulf %13, %17 : vector<8x8xf32>
    %c0_5 = arith.constant 0 : index
    %c0_6 = arith.constant 0 : index
    %19 = vector.load %arg2[%c0_5, %c0_6] : memref<8x8xf32, #tpu.memory_space<vmem>>, vector<8x8xf32>
    tpu.vector_store %arg2[%c0_5, %c0_6], %18 {strides = array<i32>} : memref<8x8xf32, #tpu.memory_space<vmem>>, vector<8x8xf32>,
    return
  }
  func.func @transform_0(%arg0: i32) -> (i32, i32) {
    %c0_i32 = arith.constant 0 : i32
    %c0_i32_0 = arith.constant 0 : i32
    return %arg0, %c0_i32 : i32, i32
  }
  func.func @transform_1(%arg0: i32) -> (i32, i32) {
    %c0_i32 = arith.constant 0 : i32
    %c0_i32_0 = arith.constant 0 : i32
    return %arg0, %c0_i32 : i32, i32
  }
}

</mosaic_0001>

<llo_original>
// kernel: tpu_custom_call.1
$region0: #{tpu_custom_call.1}
  #allocation0 [shape = 'u32[]', space=smem, size = 0x4, offset = 0x4, fixed_abs, tag = 'smem constant byte address 0x4 - core index']
  #allocation1 [shape = 'u32[144,128]{1,0:T(1,128)}', space=vmem, size = 0x12000, scoped, tag = 'internal scratch']
  %s0 = inlined_call_operand.hbm [shape: f32[8,8], index: 0, kind: input, shape index: {}]
  %s1 = inlined_call_operand.hbm [shape: f32[8,8], index: 1, kind: output, shape index: {}]
  %s2 = sld [smem:[#allocation0]]
  $region18: #{tpu_custom_call.1} parent=0
    _
  %s4 = ssub.s32 1, %s2
  %s5 = scalar_select 0, %s4, %s2
  $region1: #{tpu_custom_call.1} parent=0
    #allocation2 [shape = 'u8[4096]{0}', space=vmem, size = 0x1000, scoped, tag = 'input window, operand 0, single buffered']
    #allocation3 [shape = 's32[1]{0}', space=sflag, size = 0x4, scoped, tag = 'scoped memory for tpu_custom_call.1']
    #allocation4 [shape = 's32[1]{0}', space=sflag, size = 0x4, scoped, tag = 'scoped memory for tpu_custom_call.1']
    #allocation5 [shape = 'u8[4096]{0}', space=vmem, size = 0x1000, scoped, tag = 'output window, operand 0, single buffered']
    %6 = vsyncpa [#allocation3], 0
    %7 = vsyncpa [#allocation4], 0
    // Predicated region
    $region2: #{tpu_custom_call.1} parent=1 // pred_check
      _
    $region3: #{tpu_custom_call.1} parent=1 // pred_check_branch
      %9 = sbr.rel (0) target = $region5
    $region4: #{tpu_custom_call.1} parent=1 // pred_region
      %s11 = ssub.s32 128, 128
      %12 = vsyncadd [#allocation3], %s11
      %s14 = sshll.u32 [#allocation2], 4
      %s15 = int_to_ptr.vmem [resolvable:$true] %s14
      %17 = dma.hbm_to_vmem [thread:$0]  %s0, 128, %s15, [#allocation3]
    $region5: #{tpu_custom_call.1} parent=1 // pred_fallthru
      _
    // Predicated region
    $region6: #{tpu_custom_call.1} parent=1 // pred_check
      _
    $region7: #{tpu_custom_call.1} parent=1 // pred_check_branch
      %19 = sbr.rel (0) target = $region9
    $region8: #{tpu_custom_call.1} parent=1 // pred_region
      %20 = dma.done [#allocation3], 128
    $region9: #{tpu_custom_call.1} parent=1 // pred_fallthru
      _
    %v21 = vld [vmem:[#allocation2] sm:$0xff]
    %vm22 = vcmask 64512
    %v23 = vsel %vm22, %v21, 0.0
    %24 = vadd.xlane.f32.xlu0 %v23
    %v25 = vpop.xlane.xlu0 %24
    %v26 = vrcp.pop 8.0
    %v27 = vmul.f32 %v25, %v26
    %v28 = vsub.f32 %v21, %v27
    %v29 = vmul.f32 %v28, %v28
    %v30 = vsel %vm22, %v29, 0.0
    %31 = vadd.xlane.f32.xlu0 %v30
    %v32 = vpop.xlane.xlu0 %31
    %v33 = vmul.f32 %v32, %v26
    %v34 = vadd.f32 %v33, 1e-05
    %v35 = vrsqrt.pop %v34
    %v36 = vmul.f32 %v28, %v35
    %37 = vst.msk [vmem:[#allocation5] sm:$0xff] %vm22, %v36
    // Predicated region
    $region10: #{tpu_custom_call.1} parent=1 // pred_check
      _
    $region11: #{tpu_custom_call.1} parent=1 // pred_check_branch
      %39 = sbr.rel (0) target = $region13
    $region12: #{tpu_custom_call.1} parent=1 // pred_region
      %s41 = ssub.s32 128, 128
      %42 = vsyncadd [#allocation4], %s41
      %s44 = sshll.u32 [#allocation5], 4
      %s45 = int_to_ptr.vmem [resolvable:$true] %s44
      %47 = dma.vmem_to_hbm [thread:$0]  %s45, 128, %s1, [#allocation4]
    $region13: #{tpu_custom_call.1} parent=1 // pred_fallthru
      _
    // Predicated region
    $region14: #{tpu_custom_call.1} parent=1 // pred_check
      _
    $region15: #{tpu_custom_call.1} parent=1 // pred_check_branch
      %49 = sbr.rel (0) target = $region17
    $region16: #{tpu_custom_call.1} parent=1 // pred_region
      %50 = dma.done [#allocation4], 128
    $region17: #{tpu_custom_call.1} parent=1 // pred_fallthru
      _
    %51 = vsyncpa [#allocation3], 1
    %52 = vsyncpa [#allocation4], 1

</llo_original>
